<compile_context>
chip_gen: v7x
topology: tpu7x:2x2x1
jax: 0.10.0
libtpu: 0.0.40
codegen_flags: <defaults>
</compile_context>

<pallas_src>
import jax
import jax.numpy as jnp
from jax.experimental import pallas as pl
from jax.experimental.pallas import tpu as pltpu


def _relu_kernel(x_ref, o_ref):
    # Scalar zero: avoids a broadcast_in_dim materializing a zero block.
    o_ref[...] = jnp.maximum(x_ref[...], 0)


def _relu_2d(x2d: jax.Array) -> jax.Array:
    """ReLU over a lane-dense (rows, cols) slab; cols is a multiple of 128."""
    rows, cols = x2d.shape
    dtype = x2d.dtype
    itemsize = jnp.dtype(dtype).itemsize

    # dtype-aware sublane packing: f32 -> 8, bf16/f16 -> 16, int8/fp8 -> 32.
    sublane = {4: 8, 2: 16, 1: 32}.get(itemsize, 8)

    # Target ~2 MiB of input per grid step.
    target_bytes = 2 * 1024 * 1024
    block_rows = max(1, target_bytes // (cols * itemsize))
    if block_rows >= rows:
        block_rows = rows  # single full-array block (always a legal shape)
    else:
        # Keep non-full blocks a multiple of the packed-sublane count.
        block_rows = max(sublane, (block_rows // sublane) * sublane)

    grid = (pl.cdiv(rows, block_rows),)

    return pl.pallas_call(
        _relu_kernel,
        out_shape=jax.ShapeDtypeStruct((rows, cols), dtype),
        grid_spec=pltpu.PrefetchScalarGridSpec(
            num_scalar_prefetch=0,
            grid=grid,
            in_specs=[pl.BlockSpec((block_rows, cols), lambda i: (i, 0))],
            out_specs=pl.BlockSpec((block_rows, cols), lambda i: (i, 0)),
        ),
        compiler_params=pltpu.CompilerParams(
            dimension_semantics=("parallel",)),
        cost_estimate=pl.CostEstimate(
            flops=rows * cols,
            transcendentals=0,
            bytes_accessed=2 * rows * cols * itemsize),
    )(x2d)


def relu_pallas(x: jax.Array) -> jax.Array:
    """Elementwise ReLU (torch.relu semantics) via a Pallas TPU kernel."""
    orig_shape = x.shape
    n = x.size
    if n == 0:
        return x

    # Widest lane-dense last dim that divides the element count, so the
    # collapse is a free reshape (no pad / relayout copy on the hot path).
    cols = None
    for cand in (4096, 2048, 1024, 512, 256, 128):
        if n % cand == 0:
            cols = cand
            break

    if cols is not None:
        y2d = _relu_2d(x.reshape(n // cols, cols))
        return y2d.reshape(orig_shape)

    # Fallback for awkward sizes (n not a multiple of 128): minimal pad to a
    # wide slab, then slice the valid prefix back out.
    cols = 1024
    n_pad = -(-n // cols) * cols
    x_flat = jnp.pad(jnp.ravel(x), (0, n_pad - n))
    y2d = _relu_2d(x_flat.reshape(n_pad // cols, cols))
    return y2d.reshape(-1)[:n].reshape(orig_shape)


if __name__ == "__main__":
    key = jax.random.PRNGKey(0)
    # Small NCHW input consistent with the module's usage in a conv net.
    x = jax.random.normal(key, (2, 4, 16, 16), dtype=jnp.float32)

    y = relu_pallas(x)
    jax.block_until_ready(y)

    # Correctness check against plain JAX reference.
    y_ref = jnp.maximum(x, 0.0)
    assert y.shape == x.shape and y.dtype == x.dtype
    assert jnp.allclose(y, y_ref), "mismatch vs reference ReLU"

    print("KERNEL_OK")
</pallas_src>

<mosaic_0001>
module attributes {stable_mosaic.version = 11 : i64} {
  func.func @_relu_kernel(%arg0: i32, %arg1: memref<1x2048xf32, #tpu.memory_space<vmem>>, %arg2: memref<1x2048xf32, #tpu.memory_space<vmem>>) attributes {dimension_semantics = [#tpu.dimension_semantics<parallel>], iteration_bounds = array<i64: 1>, scalar_prefetch = 0 : i64, scratch_operands = 0 : i64, tpu.core_type = #tpu.core_type<tc>, window_params = [{transform_indices = @transform_0, window_bounds = array<i64: 1, 2048>}, {transform_indices = @transform_1, window_bounds = array<i64: 1, 2048>}]} {
    %c0 = arith.constant 0 : index
    %c0_0 = arith.constant 0 : index
    %0 = vector.load %arg1[%c0, %c0_0] : memref<1x2048xf32, #tpu.memory_space<vmem>>, vector<1x2048xf32>
    %cst = arith.constant 0.000000e+00 : f32
    %1 = vector.broadcast %cst : f32 to vector<1x2048xf32>
    %2 = arith.maximumf %0, %1 : vector<1x2048xf32>
    %c0_1 = arith.constant 0 : index
    %c0_2 = arith.constant 0 : index
    %3 = vector.load %arg2[%c0_1, %c0_2] : memref<1x2048xf32, #tpu.memory_space<vmem>>, vector<1x2048xf32>
    tpu.vector_store %arg2[%c0_1, %c0_2], %2 {strides = array<i32>} : memref<1x2048xf32, #tpu.memory_space<vmem>>, vector<1x2048xf32>,
    return
  }
  func.func @transform_0(%arg0: i32) -> (i32, i32) {
    %c0_i32 = arith.constant 0 : i32
    %c0_i32_0 = arith.constant 0 : i32
    return %arg0, %c0_i32 : i32, i32
  }
  func.func @transform_1(%arg0: i32) -> (i32, i32) {
    %c0_i32 = arith.constant 0 : i32
    %c0_i32_0 = arith.constant 0 : i32
    return %arg0, %c0_i32 : i32, i32
  }
}

</mosaic_0001>

<llo_original>
// kernel: tpu_custom_call.1
$region0: #{tpu_custom_call.1}
  #allocation0 [shape = 'u32[]', space=smem, size = 0x4, offset = 0x4, fixed_abs, tag = 'smem constant byte address 0x4 - core index']
  #allocation1 [shape = 'u32[144,128]{1,0:T(1,128)}', space=vmem, size = 0x12000, scoped, tag = 'internal scratch']
  %s0 = inlined_call_operand.hbm [shape: f32[1,2048], index: 0, kind: input, shape index: {}]
  %s1 = inlined_call_operand.hbm [shape: f32[1,2048], index: 1, kind: output, shape index: {}]
  %s2 = sld [smem:[#allocation0]]
  $region18: #{tpu_custom_call.1} parent=0
    _
  %s4 = ssub.s32 1, %s2
  %s5 = scalar_select 0, %s4, %s2
  $region1: #{tpu_custom_call.1} parent=0
    #allocation2 [shape = 'u8[8192]{0}', space=vmem, size = 0x2000, scoped, tag = 'input window, operand 0, single buffered']
    #allocation3 [shape = 's32[1]{0}', space=sflag, size = 0x4, scoped, tag = 'scoped memory for tpu_custom_call.1']
    #allocation4 [shape = 's32[1]{0}', space=sflag, size = 0x4, scoped, tag = 'scoped memory for tpu_custom_call.1']
    #allocation5 [shape = 'u8[8192]{0}', space=vmem, size = 0x2000, scoped, tag = 'output window, operand 0, single buffered']
    %6 = vsyncpa [#allocation3], 0
    %7 = vsyncpa [#allocation4], 0
    // Predicated region
    $region2: #{tpu_custom_call.1} parent=1 // pred_check
      _
    $region3: #{tpu_custom_call.1} parent=1 // pred_check_branch
      %9 = sbr.rel (0) target = $region5
    $region4: #{tpu_custom_call.1} parent=1 // pred_region
      %s11 = ssub.s32 256, 256
      %12 = vsyncadd [#allocation3], %s11
      %s14 = sshll.u32 [#allocation2], 4
      %s15 = int_to_ptr.vmem [resolvable:$true] %s14
      %17 = dma.hbm_to_vmem [thread:$0]  %s0, 256, %s15, [#allocation3]
    $region5: #{tpu_custom_call.1} parent=1 // pred_fallthru
      _
    // Predicated region
    $region6: #{tpu_custom_call.1} parent=1 // pred_check
      _
    $region7: #{tpu_custom_call.1} parent=1 // pred_check_branch
      %19 = sbr.rel (0) target = $region9
    $region8: #{tpu_custom_call.1} parent=1 // pred_region
      %20 = dma.done [#allocation3], 256
    $region9: #{tpu_custom_call.1} parent=1 // pred_fallthru
      _
    %v21 = vld [vmem:[#allocation2] sm:$0xff]
    %v22 = vld [vmem:[#allocation2 + $0x8] sm:$0xff]
    %v23 = vmax.f32 %v21, 0.0
    %v24 = vmax.f32 %v22, 0.0
    %25 = vst [vmem:[#allocation5] sm:$0xff] %v23
    %26 = vst [vmem:[#allocation5 + $0x8] sm:$0xff] %v24
    // Predicated region
    $region10: #{tpu_custom_call.1} parent=1 // pred_check
      _
    $region11: #{tpu_custom_call.1} parent=1 // pred_check_branch
      %28 = sbr.rel (0) target = $region13
    $region12: #{tpu_custom_call.1} parent=1 // pred_region
      %s30 = ssub.s32 256, 256
      %31 = vsyncadd [#allocation4], %s30
      %s33 = sshll.u32 [#allocation5], 4
      %s34 = int_to_ptr.vmem [resolvable:$true] %s33
      %36 = dma.vmem_to_hbm [thread:$0]  %s34, 256, %s1, [#allocation4]
    $region13: #{tpu_custom_call.1} parent=1 // pred_fallthru
      _
    // Predicated region
    $region14: #{tpu_custom_call.1} parent=1 // pred_check
      _
    $region15: #{tpu_custom_call.1} parent=1 // pred_check_branch
      %38 = sbr.rel (0) target = $region17
    $region16: #{tpu_custom_call.1} parent=1 // pred_region
      %39 = dma.done [#allocation4], 256
    $region17: #{tpu_custom_call.1} parent=1 // pred_fallthru
      _
    %40 = vsyncpa [#allocation3], 1
    %41 = vsyncpa [#allocation4], 1

</llo_original>
